<compile_context>
chip_gen: v7x
topology: tpu7x:2x2x1
jax: 0.10.0
libtpu: 0.0.40
codegen_flags: <defaults>
</compile_context>

<pallas_src>
import jax
import jax.numpy as jnp
from jax.experimental import pallas as pl
from jax.experimental.pallas import tpu as pltpu


def _round_up(v, m):
    return ((v + m - 1) // m) * m


def eql_kernel(x_ref, w_ref, out_ref):
    n = w_ref.shape[1]  # padded out_dim, multiple of 128 -> aligned slab stores
    z = jnp.dot(x_ref[...], w_ref[...], preferred_element_type=jnp.float32)
    out_ref[:, :n] = z.astype(out_ref.dtype)
    out_ref[:, n:2 * n] = jnp.sin(z).astype(out_ref.dtype)
    out_ref[:, 2 * n:] = (z * z).astype(out_ref.dtype)


def eql_forward(x, w_t, *, bm=None):
    """x: (B, in_dim), w_t: (in_dim, out_dim) = W.T  ->  (B, 3*out_dim)."""
    B, K = x.shape
    K_w, N = w_t.shape
    assert K == K_w, (K, K_w)
    dtype = x.dtype
    itemsize = jnp.dtype(dtype).itemsize

    # MXU / lane-dense padding.
    Kp = _round_up(K, 128)
    Np = _round_up(N, 128)

    # Pipeline-friendly batch tile (multiple of 8 sublanes for f32).
    if bm is None:
        bm = 512 if B >= 1024 else _round_up(B, 8)
    bm = max(8, _round_up(min(bm, _round_up(B, 8)), 8))
    Bp = _round_up(B, bm)

    # Zero padding is exact for all three branches (z=0, sin 0=0, 0^2=0).
    if Bp == B and Kp == K:
        x_p = x
    else:
        x_p = jnp.zeros((Bp, Kp), dtype).at[:B, :K].set(x)
    if Kp == K and Np == N:
        w_p = w_t
    else:
        w_p = jnp.zeros((Kp, Np), w_t.dtype).at[:K, :N].set(w_t)

    grid = (Bp // bm,)

    # Double-buffered x tile + weights + out tile, with headroom (v7x-safe).
    vmem_need = 2 * (bm * Kp + Kp * Np + bm * 3 * Np) * itemsize
    vmem_limit = min(max(int(1.5 * vmem_need) + (1 << 20), 4 << 20), 96 << 20)

    cost = pl.CostEstimate(
        flops=2 * Bp * Kp * Np,
        transcendentals=Bp * Np,
        bytes_accessed=itemsize * (Bp * Kp + Kp * Np + Bp * 3 * Np),
    )

    out_p = pl.pallas_call(
        eql_kernel,
        out_shape=jax.ShapeDtypeStruct((Bp, 3 * Np), dtype),
        grid_spec=pltpu.PrefetchScalarGridSpec(
            num_scalar_prefetch=0,
            grid=grid,
            in_specs=[
                # x tile marches over the batch axis.
                pl.BlockSpec((bm, Kp), lambda i: (i, 0)),
                # Full weight block, resident across the grid.
                pl.BlockSpec((Kp, Np), lambda i: (0, 0)),
            ],
            out_specs=pl.BlockSpec((bm, 3 * Np), lambda i: (i, 0)),
        ),
        compiler_params=pltpu.CompilerParams(
            dimension_semantics=("parallel",),
            vmem_limit_bytes=vmem_limit,
        ),
        cost_estimate=cost,
    )(x_p, w_p)

    if Bp == B and Np == N:
        return out_p  # already exactly [z | sin(z) | z^2]

    # Strip padding, re-assemble torch.cat order (cheap layout plumbing in XLA).
    z = out_p[:B, 0:N]
    sz = out_p[:B, Np:Np + N]
    z2 = out_p[:B, 2 * Np:2 * Np + N]
    return jnp.concatenate([z, sz, z2], axis=1)


def eql_reference(x, w_t):
    z = jnp.dot(x, w_t, precision=jax.lax.Precision.HIGHEST)
    return jnp.concatenate([z, jnp.sin(z), z * z], axis=1)


if __name__ == "__main__":
    key = jax.random.PRNGKey(0)
    k1, k2, k3, k4 = jax.random.split(key, 4)

    # 1) Small, module-like shapes (exercises K/N padding path).
    batch, in_dim, out_dim = 8, 32, 16
    x = jax.random.normal(k1, (batch, in_dim), dtype=jnp.float32)
    w = jax.random.normal(k2, (out_dim, in_dim), dtype=jnp.float32) * 0.1  # torch Linear weight
    w_t = w.T
    out = jax.block_until_ready(eql_forward(x, w_t))
    ref = eql_reference(x, w_t)
    assert out.shape == (batch, 3 * out_dim), out.shape
    assert jnp.allclose(out, ref, atol=5e-4, rtol=5e-4), "mismatch (small)"

    # 2) Tiled check: multiple grid steps, lane-dense (no-padding) fast path.
    B2, K2, N2 = 256, 128, 128
    x2 = jax.random.normal(k3, (B2, K2), dtype=jnp.float32)
    w2 = jax.random.normal(k4, (N2, K2), dtype=jnp.float32) * 0.05
    out2 = jax.block_until_ready(eql_forward(x2, w2.T, bm=64))
    ref2 = eql_reference(x2, w2.T)
    assert out2.shape == (B2, 3 * N2), out2.shape
    assert jnp.allclose(out2, ref2, atol=5e-4, rtol=5e-4), "mismatch (tiled)"

    print("KERNEL_OK")
</pallas_src>

<mosaic_0001>
module attributes {stable_mosaic.version = 11 : i64} {
  func.func @eql_kernel(%arg0: i32, %arg1: memref<8x128xf32, #tpu.memory_space<vmem>>, %arg2: memref<128x128xf32, #tpu.memory_space<vmem>>, %arg3: memref<8x384xf32, #tpu.memory_space<vmem>>) attributes {dimension_semantics = [#tpu.dimension_semantics<parallel>], iteration_bounds = array<i64: 1>, scalar_prefetch = 0 : i64, scratch_operands = 0 : i64, tpu.core_type = #tpu.core_type<tc>, window_params = [{transform_indices = @transform_0, window_bounds = array<i64: 8, 128>}, {pipeline_mode = #tpu.pipeline_mode<synchronous>, transform_indices = @transform_1, window_bounds = array<i64: 128, 128>}, {transform_indices = @transform_2, window_bounds = array<i64: 8, 384>}]} {
    %c0 = arith.constant 0 : index
    %c0_0 = arith.constant 0 : index
    %0 = vector.load %arg1[%c0, %c0_0] : memref<8x128xf32, #tpu.memory_space<vmem>>, vector<8x128xf32>
    %c0_1 = arith.constant 0 : index
    %c0_2 = arith.constant 0 : index
    %1 = vector.load %arg2[%c0_1, %c0_2] : memref<128x128xf32, #tpu.memory_space<vmem>>, vector<128x128xf32>
    %cst = arith.constant dense<0.000000e+00> : vector<8x128xf32>
    %2 = tpu.matmul %0, %1, %cst {dimension_numbers = #tpu.dot_dimension_numbers<[1], [0], [0], [1], [0, 0, 1, 1], [], []>} : vector<8x128xf32>, vector<128x128xf32>, vector<8x128xf32> -> vector<8x128xf32>
    %c0_3 = arith.constant 0 : index
    %c0_4 = arith.constant 0 : index
    %3 = vector.load %arg3[%c0_3, %c0_4] : memref<8x384xf32, #tpu.memory_space<vmem>>, vector<8x128xf32>
    tpu.vector_store %arg3[%c0_3, %c0_4], %2 {strides = array<i32>} : memref<8x384xf32, #tpu.memory_space<vmem>>, vector<8x128xf32>,
    %4 = math.sin %2 : vector<8x128xf32>
    %c0_5 = arith.constant 0 : index
    %c128 = arith.constant 128 : index
    %5 = vector.load %arg3[%c0_5, %c128] : memref<8x384xf32, #tpu.memory_space<vmem>>, vector<8x128xf32>
    tpu.vector_store %arg3[%c0_5, %c128], %4 {strides = array<i32>} : memref<8x384xf32, #tpu.memory_space<vmem>>, vector<8x128xf32>,
    %6 = arith.mulf %2, %2 : vector<8x128xf32>
    %c0_6 = arith.constant 0 : index
    %c256 = arith.constant 256 : index
    %7 = vector.load %arg3[%c0_6, %c256] : memref<8x384xf32, #tpu.memory_space<vmem>>, vector<8x128xf32>
    tpu.vector_store %arg3[%c0_6, %c256], %6 {strides = array<i32>} : memref<8x384xf32, #tpu.memory_space<vmem>>, vector<8x128xf32>,
    return
  }
  func.func @transform_0(%arg0: i32) -> (i32, i32) {
    %c0_i32 = arith.constant 0 : i32
    %c0_i32_0 = arith.constant 0 : i32
    return %arg0, %c0_i32 : i32, i32
  }
  func.func @transform_1(%arg0: i32) -> (i32, i32) {
    %c0_i32 = arith.constant 0 : i32
    %c0_i32_0 = arith.constant 0 : i32
    %c0_i32_1 = arith.constant 0 : i32
    return %c0_i32, %c0_i32_0 : i32, i32
  }
  func.func @transform_2(%arg0: i32) -> (i32, i32) {
    %c0_i32 = arith.constant 0 : i32
    %c0_i32_0 = arith.constant 0 : i32
    return %arg0, %c0_i32 : i32, i32
  }
}

</mosaic_0001>

<llo_original>
// kernel: tpu_custom_call.1
$region0: #{tpu_custom_call.1}
  #allocation0 [shape = 'u32[]', space=smem, size = 0x4, offset = 0x4, fixed_abs, tag = 'smem constant byte address 0x4 - core index']
  #allocation1 [shape = 'u32[144,128]{1,0:T(1,128)}', space=vmem, size = 0x12000, scoped, tag = 'internal scratch']
  %s0 = inlined_call_operand.hbm [shape: f32[8,128], index: 0, kind: input, shape index: {}]
  %s1 = inlined_call_operand.hbm [shape: f32[128,128], index: 1, kind: input, shape index: {}]
  %s2 = inlined_call_operand.hbm [shape: f32[8,384], index: 2, kind: output, shape index: {}]
  %s3 = sld [smem:[#allocation0]]
  $region26: #{tpu_custom_call.1} parent=0
    _
  %s5 = ssub.s32 1, %s3
  %s6 = scalar_select 0, %s5, %s3
  $region1: #{tpu_custom_call.1} parent=0
    #allocation2 [shape = 'u8[4096]{0}', space=vmem, size = 0x1000, scoped, tag = 'input window, operand 0, single buffered']
    #allocation3 [shape = 's32[1]{0}', space=sflag, size = 0x4, scoped, tag = 'scoped memory for tpu_custom_call.1']
    #allocation4 [shape = 's32[1]{0}', space=sflag, size = 0x4, scoped, tag = 'scoped memory for tpu_custom_call.1']
    #allocation5 [shape = 'u8[65536]{0}', space=vmem, size = 0x10000, scoped, tag = 'input window, operand 1, single buffered']
    #allocation6 [shape = 's32[1]{0}', space=sflag, size = 0x4, scoped, tag = 'scoped memory for tpu_custom_call.1']
    #allocation7 [shape = 'u8[12288]{0}', space=vmem, size = 0x3000, scoped, tag = 'output window, operand 0, single buffered']
    %7 = vsyncpa [#allocation3], 0
    %8 = vsyncpa [#allocation6], 0
    %9 = vsyncpa [#allocation4], 0
    // Predicated region
    $region2: #{tpu_custom_call.1} parent=1 // pred_check
      _
    $region3: #{tpu_custom_call.1} parent=1 // pred_check_branch
      %11 = sbr.rel (0) target = $region5
    $region4: #{tpu_custom_call.1} parent=1 // pred_region
      %s13 = ssub.s32 128, 128
      %14 = vsyncadd [#allocation3], %s13
      %s16 = sshll.u32 [#allocation2], 4
      %s17 = int_to_ptr.vmem [resolvable:$true] %s16
      %19 = dma.hbm_to_vmem [thread:$0]  %s0, 128, %s17, [#allocation3]
    $region5: #{tpu_custom_call.1} parent=1 // pred_fallthru
      _
    // Predicated region
    $region6: #{tpu_custom_call.1} parent=1 // pred_check
      _
    $region7: #{tpu_custom_call.1} parent=1 // pred_check_branch
      %21 = sbr.rel (0) target = $region9
    $region8: #{tpu_custom_call.1} parent=1 // pred_region
      %s23 = ssub.s32 2048, 2048
      %24 = vsyncadd [#allocation6], %s23
      %s25 = sshll.u32 [#allocation5], 4
      %s26 = int_to_ptr.vmem [resolvable:$true] %s25
      %31 = dma.hbm_to_vmem [thread:$0]  %s1, 2048, %s26, [#allocation6], 128, 128, 8
    $region9: #{tpu_custom_call.1} parent=1 // pred_fallthru
      _
    // Predicated region
    $region10: #{tpu_custom_call.1} parent=1 // pred_check
      _
    $region11: #{tpu_custom_call.1} parent=1 // pred_check_branch
      %33 = sbr.rel (0) target = $region13
    $region12: #{tpu_custom_call.1} parent=1 // pred_region
      %34 = dma.done [#allocation3], 128
    $region13: #{tpu_custom_call.1} parent=1 // pred_fallthru
      _
    // Predicated region
    $region14: #{tpu_custom_call.1} parent=1 // pred_check
      _
    $region15: #{tpu_custom_call.1} parent=1 // pred_check_branch
      %36 = sbr.rel (0) target = $region17
    $region16: #{tpu_custom_call.1} parent=1 // pred_region
      %37 = dma.done [#allocation6], 2048
    $region17: #{tpu_custom_call.1} parent=1 // pred_fallthru
      _
    %v38 = vld [vmem:[#allocation2] sm:$0xff]
    %v39 = vld [vmem:[#allocation5] sm:$0xff]
    %v40 = vld [vmem:[#allocation5 + $0x8] sm:$0xff]
    %v41 = vld [vmem:[#allocation5 + $0x10] sm:$0xff]
    %v42 = vld [vmem:[#allocation5 + $0x18] sm:$0xff]
    %v43 = vld [vmem:[#allocation5 + $0x20] sm:$0xff]
    %v44 = vld [vmem:[#allocation5 + $0x28] sm:$0xff]
    %v45 = vld [vmem:[#allocation5 + $0x30] sm:$0xff]
    %v46 = vld [vmem:[#allocation5 + $0x38] sm:$0xff]
    %v47 = vld [vmem:[#allocation5 + $0x40] sm:$0xff]
    %v48 = vld [vmem:[#allocation5 + $0x48] sm:$0xff]
    %v49 = vld [vmem:[#allocation5 + $0x50] sm:$0xff]
    %v50 = vld [vmem:[#allocation5 + $0x58] sm:$0xff]
    %v51 = vld [vmem:[#allocation5 + $0x60] sm:$0xff]
    %v52 = vld [vmem:[#allocation5 + $0x68] sm:$0xff]
    %v53 = vld [vmem:[#allocation5 + $0x70] sm:$0xff]
    %v54 = vld [vmem:[#allocation5 + $0x78] sm:$0xff]
    %55 = vmatprep.subr.mxu0 0.0
    %56 = vmatpush1.msra.mxu0 %v39
    %57 = vmatprep.subr.mxu0 0.0
    %58 = vmatpush1.msra.mxu0 %v40
    %59 = vmatprep.subr.mxu0 0.0
    %60 = vmatpush1.msra.mxu0 %v41
    %61 = vmatprep.subr.mxu0 0.0
    %62 = vmatpush1.msra.mxu0 %v42
    %63 = vmatprep.subr.mxu0 0.0
    %64 = vmatpush1.msra.mxu0 %v43
    %65 = vmatprep.subr.mxu0 0.0
    %66 = vmatpush1.msra.mxu0 %v44
    %67 = vmatprep.subr.mxu0 0.0
    %68 = vmatpush1.msra.mxu0 %v45
    %69 = vmatprep.subr.mxu0 0.0
    %70 = vmatpush1.msra.mxu0 %v46
    %71 = vmatprep.subr.mxu0 0.0
    %72 = vmatpush1.msra.mxu0 %v47
    %73 = vmatprep.subr.mxu0 0.0
    %74 = vmatpush1.msra.mxu0 %v48
    %75 = vmatprep.subr.mxu0 0.0
    %76 = vmatpush1.msra.mxu0 %v49
    %77 = vmatprep.subr.mxu0 0.0
    %78 = vmatpush1.msra.mxu0 %v50
    %79 = vmatprep.subr.mxu0 0.0
    %80 = vmatpush1.msra.mxu0 %v51
    %81 = vmatprep.subr.mxu0 0.0
    %82 = vmatpush1.msra.mxu0 %v52
    %83 = vmatprep.subr.mxu0 0.0
    %84 = vmatpush1.msra.mxu0 %v53
    %85 = vmatprep.subr.mxu0 0.0
    %86 = vmatpush1.msra.mxu0 %v54
    %87 = vmatprep.subr.mxu0 0.0
    %88 = vmatpush1.msra.mxu0 0.0
    %89 = vmatprep.subr.mxu0 0.0
    %90 = vmatpush1.msra.mxu0 0.0
    %91 = vmatprep.subr.mxu0 0.0
    %92 = vmatpush1.msra.mxu0 0.0
    %93 = vmatprep.subr.mxu0 0.0
    %94 = vmatpush1.msra.mxu0 0.0
    %95 = vmatprep.subr.mxu0 0.0
    %96 = vmatpush1.msra.mxu0 0.0
    %97 = vmatprep.subr.mxu0 0.0
    %98 = vmatpush1.msra.mxu0 0.0
    %99 = vmatprep.subr.mxu0 0.0
    %100 = vmatpush1.msra.mxu0 0.0
    %101 = vmatprep.subr.mxu0 0.0
    %102 = vmatpush1.msra.mxu0 0.0
    %103 = vmatprep.subr.mxu0 0.0
    %104 = vmatpush1.msra.mxu0 0.0
    %105 = vmatprep.subr.mxu0 0.0
    %106 = vmatpush1.msra.mxu0 0.0
    %107 = vmatprep.subr.mxu0 0.0
    %108 = vmatpush1.msra.mxu0 0.0
    %109 = vmatprep.subr.mxu0 0.0
    %110 = vmatpush1.msra.mxu0 0.0
    %111 = vmatprep.subr.mxu0 0.0
    %112 = vmatpush1.msra.mxu0 0.0
    %113 = vmatprep.subr.mxu0 0.0
    %114 = vmatpush1.msra.mxu0 0.0
    %115 = vmatprep.subr.mxu0 0.0
    %116 = vmatpush1.msra.mxu0 0.0
    %117 = vmatprep.subr.mxu0 0.0
    %118 = vmatpush1.msra.mxu0 0.0
    %119 = vmatprep.mubr.f32.mxu0 0.0
    %120 = vmatmul.mubr.f32.gmra.mrb[0].mxu0 %v38
    %v121 = vpop.f32.mrb[0].mxu0
    %v122 = vadd.f32 0.0, %v121
    %v123 = vpop.f32.mrb[0].mxu0
    %124 = vdwg.mxu0
    %125 = vst [vmem:[#allocation7] sm:$0xff] %v122
    %v126 = vand.u32 2147483647, %v122
    %vm127 = vcmp.le.f32.partialorder %v126, 0.7853982
    %vm128 = vcmp.lt.s32.totalorder %v122, 0
    %v129 = vand.u32 %v122, 2139095040
    %v130 = vshrl.u32 %v129, 23
    %v131 = vsub.s32 %v130, 127
    %v132 = vand.u32 2147483647, %v122
    %v133 = vand.u32 %v132, 8388607
    %v134 = vor.u32 %v133, 8388608
    %v135 = vsub.s32 0, %v134
    %v136 = vadd.s32 %v131, 1
    %vm137 = vcmp.gt.s32.totalorder %v136, 0
    %v138 = vsel %vm137, %v136, 0
    %v139 = vshrl.u32 %v138, 5
    %v140 = vand.u32 %v138, 31
    %v141 = vsub.s32 32, %v140
    %v142 = vshrl.u32 683565275, %v141
    %v143 = vshll.u32 683565275, %v140
    %v144 = vshrl.u32 2475754826, %v141
    %v145 = vor.u32 %v143, %v144
    %v146 = vshll.u32 2475754826, %v140
    %v147 = vshrl.u32 2131351028, %v141
    %v148 = vor.u32 %v146, %v147
    %v149 = vshll.u32 2131351028, %v140
    %v150 = vshrl.u32 2102212464, %v141
    %v151 = vor.u32 %v149, %v150
    %v152 = vshll.u32 2102212464, %v140
    %v153 = vshrl.u32 920167782, %v141
    %v154 = vor.u32 %v152, %v153
    %v155 = vshll.u32 920167782, %v140
    %v156 = vshrl.u32 1326507024, %v141
    %v157 = vor.u32 %v155, %v156
    %vm158 = vcmp.lt.s32.totalorder %v139, 1
    %vm159 = vcmp.lt.s32.totalorder %v139, 2
    %vm160 = vcmp.lt.s32.totalorder %v139, 3
    %vm161 = vcmp.lt.s32.totalorder %v139, 4
    %v162 = vsel %vm158, %v142, %v145
    %v163 = vsel %vm161, %v151, 2102212464
    %v164 = vsel %vm160, %v148, %v163
    %v165 = vsel %vm159, %v162, %v164
    %v166 = vsel %vm158, %v145, %v148
    %v167 = vsel %vm161, %v154, 920167782
    %v168 = vsel %vm160, %v151, %v167
    %v169 = vsel %vm159, %v166, %v168
    %v170 = vsel %vm158, %v148, %v151
    %v171 = vsel %vm161, %v157, 1326507024
    %v172 = vsel %vm160, %v154, %v171
    %v173 = vsel %vm159, %v170, %v172
    %v174 = vshll.u32 %v134, 8
    %v175 = vmul.u32.u64.compose %v174, %v173
    %v176 = vextract.low.u32 %v175
    %v177 = vextract.high.u32 %v175
    %v178 = vmul.u32.u64.compose %v174, %v169
    %v179 = vextract.low.u32 %v178
    %v180 = vextract.high.u32 %v178
    %v181 = vmul.u32 %v174, %v165
    %v182 = vadd.s32 %v177, %v179
    %vm183 = vc.u32 %v177, %v179
    %v184 = vadd.s32 %v180, 1
    %v185 = vsel %vm183, %v184, %v180
    %v186 = vadd.s32 %v181, %v185
    %v187 = vadd.s32 %v186, 536870912
    %v188 = vshrl.u32 %v187, 30
    %v189 = vshll.u32 %v188, 30
    %v190 = vsub.s32 %v186, %v189
    %vm191 = vcmp.lt.s32.totalorder %v190, 0
    %v192 = vsub.s32 0, %v190
    %v193 = vsel %vm191, %v192, %v190
    %v194 = vclz %v193
    %v195 = vsub.s32 %v194, 2
    %vm196 = vcmp.gt.s32.totalorder 0, %v195
    %v197 = vsel %vm196, 0, %v195
    %v198 = vsub.s32 32, %v197
    %v199 = vshll.u32 %v190, %v197
    %v200 = vshrl.u32 %v182, %v198
    %v201 = vor.u32 %v199, %v200
    %v202 = vsub.s32 4294967266, %v197
    %v203 = vadd.s32 %v202, 127
    %v204 = vshll.u32 %v203, 23
    %v205 = vor.u32 4788187, %v204
    %v206 = vand.u32 2147483647, %v205
    %v208 = vcvt.s32.f32 %v201
    %v209 = vmul.f32 %v208, %v206
    %v210 = vxor.u32 %v209, 2147483648
    %v211 = vsel %vm128, %v210, %v209
    %v212 = vsub.s32 4, %v188
    %v213 = vsel %vm128, %v212, %v188
    %v214 = vsel %vm127, %v122, %v211
    %v215 = vsel %vm127, 0, %v213
    %v216 = vcosq.f32.pop %v214
    %v217 = vsinq.f32.pop %v214
    %vm218 = vweird.f32 %v122
    %v219 = vadd.s32 %v215, 3
    %v220 = vand.u32 %v219, 3
    %vm221 = vcmp.lt.s32.totalorder %v220, 2
    %vm222 = vcmp.eq.s32.totalorder %v220, 0
    %v223 = vxor.u32 %v217, 2147483648
    %v224 = vsel %vm222, %v216, %v223
    %vm225 = vcmp.eq.s32.totalorder %v220, 2
    %v226 = vxor.u32 %v216, 2147483648
    %v227 = vsel %vm225, %v226, %v217
    %v228 = vsel %vm221, %v224, %v227
    %v229 = vsel %vm218, nan, %v228
    %230 = vst [vmem:[#allocation7 + $0x8] sm:$0xff] %v229
    %v231 = vmul.f32 %v122, %v122
    %232 = vst [vmem:[#allocation7 + $0x10] sm:$0xff] %v231
    // Predicated region
    $region18: #{tpu_custom_call.1} parent=1 // pred_check
      _
    $region19: #{tpu_custom_call.1} parent=1 // pred_check_branch
      %234 = sbr.rel (0) target = $region21
    $region20: #{tpu_custom_call.1} parent=1 // pred_region
      %s236 = ssub.s32 384, 384
      %237 = vsyncadd [#allocation4], %s236
      %s239 = sshll.u32 [#allocation7], 4
      %s240 = int_to_ptr.vmem [resolvable:$true] %s239
      %242 = dma.vmem_to_hbm [thread:$0]  %s240, 384, %s2, [#allocation4]
    $region21: #{tpu_custom_call.1} parent=1 // pred_fallthru
      _
    // Predicated region
    $region22: #{tpu_custom_call.1} parent=1 // pred_check
      _
    $region23: #{tpu_custom_call.1} parent=1 // pred_check_branch
      %244 = sbr.rel (0) target = $region25
    $region24: #{tpu_custom_call.1} parent=1 // pred_region
      %245 = dma.done [#allocation4], 384
    $region25: #{tpu_custom_call.1} parent=1 // pred_fallthru
      _
    %246 = vsyncpa [#allocation3], 1
    %247 = vsyncpa [#allocation6], 1
    %248 = vsyncpa [#allocation4], 1

</llo_original>
